<compile_context>
chip_gen: v5e
topology: v5e:2x2
jax: 0.10.0
libtpu: 0.0.40
codegen_flags: <defaults>
</compile_context>

<pallas_src>
import functools

import jax
import jax.numpy as jnp
from jax.experimental import pallas as pl
from jax.experimental.pallas import tpu as pltpu


def _round_up(x, m):
    return (x + m - 1) // m * m


# --------------------------------------------------------------------------
# Pallas kernel: y = x @ W_t + b   (tiled, f32 accumulation on the MXU)
# --------------------------------------------------------------------------
def _linear_kernel(x_ref, w_ref, b_ref, o_ref, acc_ref):
    k = pl.program_id(2)

    @pl.when(k == 0)
    def _():
        acc_ref[...] = jnp.zeros_like(acc_ref)

    acc_ref[...] += jnp.dot(
        x_ref[...], w_ref[...], preferred_element_type=jnp.float32
    )

    @pl.when(k == pl.num_programs(2) - 1)
    def _():
        o_ref[...] = (acc_ref[...] + b_ref[...]).astype(o_ref.dtype)


@functools.partial(jax.jit, static_argnames=("tm", "tn", "tk"))
def pallas_linear(x, w_t, b, *, tm=256, tn=256, tk=512):
    """x: [B, IN], w_t: [IN, OUT] (pre-transposed), b: [OUT] or [1, OUT] -> [B, OUT]."""
    B, IN = x.shape
    K2, OUT = w_t.shape
    assert K2 == IN, "weight / input feature mismatch"

    # Pad to lane/sublane-dense shapes: last dim multiple of 128, 2nd-last of 8.
    Mp = _round_up(B, 8)
    Kp = _round_up(IN, 128)
    Np = _round_up(OUT, 128)

    # Tile sizes capped for VMEM (double-buffered f32 tiles stay ~2.6 MiB even
    # at the caps), then the padded dims rounded up to whole tiles.
    tm = min(tm, Mp)
    tn = min(tn, Np)
    tk = min(tk, Kp)
    Mp = _round_up(Mp, tm)
    Np = _round_up(Np, tn)
    Kp = _round_up(Kp, tk)

    xp = jnp.pad(x.astype(jnp.float32), ((0, Mp - B), (0, Kp - IN)))
    wp = jnp.pad(w_t.astype(jnp.float32), ((0, Kp - IN), (0, Np - OUT)))
    bp = jnp.pad(b.astype(jnp.float32).reshape(1, -1), ((0, 0), (0, Np - OUT)))

    grid = (Mp // tm, Np // tn, Kp // tk)

    cost = pl.CostEstimate(
        flops=2 * Mp * Np * Kp,
        transcendentals=0,
        bytes_accessed=4 * (Mp * Kp + Kp * Np + Np + Mp * Np),
    )

    out_p = pl.pallas_call(
        _linear_kernel,
        out_shape=jax.ShapeDtypeStruct((Mp, Np), jnp.float32),
        grid=grid,
        in_specs=[
            pl.BlockSpec((tm, tk), lambda i, j, k: (i, k)),
            pl.BlockSpec((tk, tn), lambda i, j, k: (k, j)),
            pl.BlockSpec((1, tn), lambda i, j, k: (0, j)),
        ],
        out_specs=pl.BlockSpec((tm, tn), lambda i, j, k: (i, j)),
        scratch_shapes=[pltpu.VMEM((tm, tn), jnp.float32)],
        compiler_params=pltpu.CompilerParams(
            dimension_semantics=("parallel", "parallel", "arbitrary"),
        ),
        cost_estimate=cost,
    )(xp, wp, bp)

    # Slice the zero-padded rows/cols back off (fused by jit with the pad).
    return out_p[:B, :OUT]


# --------------------------------------------------------------------------
# Inner module (what IgnoreTrainingArg wraps): a small Linear head.
# --------------------------------------------------------------------------
class LinearHead:
    def __init__(self, in_features, out_features, key):
        kw, kb = jax.random.split(key)
        bound = 1.0 / jnp.sqrt(in_features)
        # nn.Linear shapes: weight [out, in], bias [out].
        w = jax.random.uniform(kw, (out_features, in_features),
                               minval=-bound, maxval=bound, dtype=jnp.float32)
        b = jax.random.uniform(kb, (out_features,),
                               minval=-bound, maxval=bound, dtype=jnp.float32)
        # Store pre-transposed so the kernel does a single MXU matmul.
        self.w_t = jnp.asarray(w.T)    # [in, out]
        self.b = jnp.asarray(b)        # [out]

    def __call__(self, x):
        # Amortize the pallas_call: fold all leading dims (batch, time, heads,
        # ...) into one matmul instead of many tiny launches.
        lead = x.shape[:-1]
        y = pallas_linear(x.reshape(-1, x.shape[-1]), self.w_t, self.b)
        return y.reshape(*lead, y.shape[-1])


# --------------------------------------------------------------------------
# IgnoreTrainingArg: exact forward semantics of the PyTorch wrapper.
# --------------------------------------------------------------------------
class IgnoreTrainingArg:
    def __init__(self, module):
        self.module = module

    def __call__(self, *args, **kwargs):
        if "training" in kwargs:
            del kwargs["training"]
        return self.module(*args, **kwargs)


if __name__ == "__main__":
    key = jax.random.PRNGKey(0)
    k_x, k_m = jax.random.split(key)

    B, IN, OUT = 2, 32, 16
    x = jax.random.normal(k_x, (B, IN), dtype=jnp.float32)

    wrapped = IgnoreTrainingArg(LinearHead(IN, OUT, k_m))

    # `training=True` must be silently dropped by the wrapper.
    out = wrapped(x, training=True)
    out = jax.block_until_ready(out)

    # Sanity check against a plain-JAX reference of the inner module.
    ref = x @ wrapped.module.w_t + wrapped.module.b[None, :]
    assert out.shape == (B, OUT)
    assert jnp.allclose(out, ref, atol=1e-5, rtol=1e-5)

    print("KERNEL_OK")
</pallas_src>

<mosaic_0001>
module attributes {stable_mosaic.version = 11 : i64} {
  func.func @_linear_kernel(%arg0: i32, %arg1: i32, %arg2: i32, %arg3: memref<8x128xf32, #tpu.memory_space<vmem>>, %arg4: memref<128x128xf32, #tpu.memory_space<vmem>>, %arg5: memref<1x128xf32, #tpu.memory_space<vmem>>, %arg6: memref<8x128xf32, #tpu.memory_space<vmem>>, %arg7: memref<8x128xf32, #tpu.memory_space<vmem>>) attributes {dimension_semantics = [#tpu.dimension_semantics<parallel>, #tpu.dimension_semantics<parallel>, #tpu.dimension_semantics<arbitrary>], iteration_bounds = array<i64: 1, 1, 1>, scalar_prefetch = 0 : i64, scratch_operands = 1 : i64, tpu.core_type = #tpu.core_type<tc>, window_params = [{transform_indices = @transform_0, window_bounds = array<i64: 8, 128>}, {transform_indices = @transform_1, window_bounds = array<i64: 128, 128>}, {transform_indices = @transform_2, window_bounds = array<i64: 1, 128>}, {transform_indices = @transform_3, window_bounds = array<i64: 8, 128>}]} {
    %c0_i32 = arith.constant 0 : i32
    %0 = arith.cmpi eq, %arg2, %c0_i32 : i32
    %1 = arith.extui %0 : i1 to i32
    %c0_i32_0 = arith.constant 0 : i32
    %2 = arith.cmpi ne, %1, %c0_i32_0 : i32
    scf.if %2 {
      %cst_10 = arith.constant 0.000000e+00 : f32
      %12 = vector.broadcast %cst_10 : f32 to vector<8x128xf32>
      %c0_11 = arith.constant 0 : index
      %c0_12 = arith.constant 0 : index
      %13 = vector.load %arg7[%c0_11, %c0_12] : memref<8x128xf32, #tpu.memory_space<vmem>>, vector<8x128xf32>
      tpu.vector_store %arg7[%c0_11, %c0_12], %12 {strides = array<i32>} : memref<8x128xf32, #tpu.memory_space<vmem>>, vector<8x128xf32>,
    } else {
    }
    %c0 = arith.constant 0 : index
    %c0_1 = arith.constant 0 : index
    %3 = vector.load %arg7[%c0, %c0_1] : memref<8x128xf32, #tpu.memory_space<vmem>>, vector<8x128xf32>
    %c0_2 = arith.constant 0 : index
    %c0_3 = arith.constant 0 : index
    %4 = vector.load %arg3[%c0_2, %c0_3] : memref<8x128xf32, #tpu.memory_space<vmem>>, vector<8x128xf32>
    %c0_4 = arith.constant 0 : index
    %c0_5 = arith.constant 0 : index
    %5 = vector.load %arg4[%c0_4, %c0_5] : memref<128x128xf32, #tpu.memory_space<vmem>>, vector<128x128xf32>
    %cst = arith.constant dense<0.000000e+00> : vector<8x128xf32>
    %6 = tpu.matmul %4, %5, %cst {dimension_numbers = #tpu.dot_dimension_numbers<[1], [0], [0], [1], [0, 0, 1, 1], [], []>} : vector<8x128xf32>, vector<128x128xf32>, vector<8x128xf32> -> vector<8x128xf32>
    %7 = arith.addf %3, %6 : vector<8x128xf32>
    %c0_6 = arith.constant 0 : index
    %c0_7 = arith.constant 0 : index
    %8 = vector.load %arg7[%c0_6, %c0_7] : memref<8x128xf32, #tpu.memory_space<vmem>>, vector<8x128xf32>
    tpu.vector_store %arg7[%c0_6, %c0_7], %7 {strides = array<i32>} : memref<8x128xf32, #tpu.memory_space<vmem>>, vector<8x128xf32>,
    %c0_i32_8 = arith.constant 0 : i32
    %9 = arith.cmpi eq, %arg2, %c0_i32_8 : i32
    %10 = arith.extui %9 : i1 to i32
    %c0_i32_9 = arith.constant 0 : i32
    %11 = arith.cmpi ne, %10, %c0_i32_9 : i32
    scf.if %11 {
      %c0_10 = arith.constant 0 : index
      %c0_11 = arith.constant 0 : index
      %12 = vector.load %arg7[%c0_10, %c0_11] : memref<8x128xf32, #tpu.memory_space<vmem>>, vector<8x128xf32>
      %c0_12 = arith.constant 0 : index
      %c0_13 = arith.constant 0 : index
      %13 = vector.load %arg5[%c0_12, %c0_13] : memref<1x128xf32, #tpu.memory_space<vmem>>, vector<1x128xf32>
      %14 = vector.broadcast %13 : vector<1x128xf32> to vector<8x128xf32>
      %15 = arith.addf %12, %14 : vector<8x128xf32>
      %c0_14 = arith.constant 0 : index
      %c0_15 = arith.constant 0 : index
      %16 = vector.load %arg6[%c0_14, %c0_15] : memref<8x128xf32, #tpu.memory_space<vmem>>, vector<8x128xf32>
      tpu.vector_store %arg6[%c0_14, %c0_15], %15 {strides = array<i32>} : memref<8x128xf32, #tpu.memory_space<vmem>>, vector<8x128xf32>,
    } else {
    }
    return
  }
  func.func @transform_0(%arg0: i32, %arg1: i32, %arg2: i32) -> (i32, i32) {
    %c0_i32 = arith.constant 0 : i32
    return %arg0, %arg2 : i32, i32
  }
  func.func @transform_1(%arg0: i32, %arg1: i32, %arg2: i32) -> (i32, i32) {
    %c0_i32 = arith.constant 0 : i32
    return %arg2, %arg1 : i32, i32
  }
  func.func @transform_2(%arg0: i32, %arg1: i32, %arg2: i32) -> (i32, i32) {
    %c0_i32 = arith.constant 0 : i32
    %c0_i32_0 = arith.constant 0 : i32
    return %c0_i32, %arg1 : i32, i32
  }
  func.func @transform_3(%arg0: i32, %arg1: i32, %arg2: i32) -> (i32, i32) {
    %c0_i32 = arith.constant 0 : i32
    return %arg0, %arg1 : i32, i32
  }
}

</mosaic_0001>

<llo_original>
// kernel: pallas_linear.1
$region0: #{pallas_linear.1}
  #allocation0 [shape = 'u32[]', space=smem, size = 0x4, offset = 0x4, fixed_abs, tag = 'smem constant byte address 0x4 - core index']
  #allocation1 [shape = 'u32[72,128]{1,0:T(1,128)}', space=vmem, size = 0x9000, scoped, tag = 'internal scratch']
  #allocation2 [shape = 'f32[8,128]{1,0:T(8,128)}', space=vmem, size = 0x1000, scoped, tag = 'scratch operand']
  %s0 = inlined_call_operand.vmem [shape: f32[8,128], index: 0, kind: input, shape index: {}]
  %s1 = inlined_call_operand.vmem [shape: f32[128,128], index: 1, kind: input, shape index: {}]
  %s2 = inlined_call_operand.vmem [shape: f32[1,128], index: 2, kind: input, shape index: {}]
  %s3 = inlined_call_operand.vmem [shape: f32[8,128], index: 3, kind: output, shape index: {}]
  %s4 = sld [smem:[#allocation0]]
  $region30: #{pallas_linear.1} parent=0
    _
  %s6 = ssub.s32 1, %s4
  %s7 = scalar_select 0, %s6, %s4
  // Predicated region
  $region2: #{pallas_linear.1} parent=0 // pred_check
    _
  $region3: #{pallas_linear.1} parent=0 // pred_check_branch
    %9 = sbr.rel (0) target = $region5
  $region4: #{pallas_linear.1} parent=0 // pred_region
    _
  $region5: #{pallas_linear.1} parent=0 // pred_fallthru
    _
  // Predicated region
  $region6: #{pallas_linear.1} parent=0 // pred_check
    _
  $region7: #{pallas_linear.1} parent=0 // pred_check_branch
    %11 = sbr.rel (0) target = $region9
  $region8: #{pallas_linear.1} parent=0 // pred_region
    _
  $region9: #{pallas_linear.1} parent=0 // pred_fallthru
    _
  // Predicated region
  $region10: #{pallas_linear.1} parent=0 // pred_check
    _
  $region11: #{pallas_linear.1} parent=0 // pred_check_branch
    %13 = sbr.rel (0) target = $region13
  $region12: #{pallas_linear.1} parent=0 // pred_region
    _
  $region13: #{pallas_linear.1} parent=0 // pred_fallthru
    _
  %p14 = scmp.eq.s32.totalorder 0, 0
  // Predicated region
  $region14: #{pallas_linear.1} parent=0 // pred_check
    %p15 = pneg %p14
  $region15: #{pallas_linear.1} parent=0 // pred_check_branch
    %17 = sbr.rel (%p15) target = $region17
  $region16: #{pallas_linear.1} parent=0 // pred_region
    %18 = vst [vmem:[#allocation2] sm:$0xff] 0.0
  $region17: #{pallas_linear.1} parent=0 // pred_fallthru
    _
  %v19 = vld [vmem:[#allocation2] sm:$0xff]
  %v20 = vld [vmem:[%s0] sm:$0xff]
  %v21 = vld [vmem:[%s1] sm:$0xff]
  %v22 = vld [vmem:[%s1 + $0x8] sm:$0xff]
  %v23 = vld [vmem:[%s1 + $0x10] sm:$0xff]
  %v24 = vld [vmem:[%s1 + $0x18] sm:$0xff]
  %v25 = vld [vmem:[%s1 + $0x20] sm:$0xff]
  %v26 = vld [vmem:[%s1 + $0x28] sm:$0xff]
  %v27 = vld [vmem:[%s1 + $0x30] sm:$0xff]
  %v28 = vld [vmem:[%s1 + $0x38] sm:$0xff]
  %v29 = vld [vmem:[%s1 + $0x40] sm:$0xff]
  %v30 = vld [vmem:[%s1 + $0x48] sm:$0xff]
  %v31 = vld [vmem:[%s1 + $0x50] sm:$0xff]
  %v32 = vld [vmem:[%s1 + $0x58] sm:$0xff]
  %v33 = vld [vmem:[%s1 + $0x60] sm:$0xff]
  %v34 = vld [vmem:[%s1 + $0x68] sm:$0xff]
  %v35 = vld [vmem:[%s1 + $0x70] sm:$0xff]
  %v36 = vld [vmem:[%s1 + $0x78] sm:$0xff]
  %37 = vmatpush.msra.mxu0 %v36
  %38 = vmatpush.msra.mxu0 %v35
  %39 = vmatpush.msra.mxu0 %v34
  %40 = vmatpush.msra.mxu0 %v33
  %41 = vmatpush.msra.mxu0 %v32
  %42 = vmatpush.msra.mxu0 %v31
  %43 = vmatpush.msra.mxu0 %v30
  %44 = vmatpush.msra.mxu0 %v29
  %45 = vmatpush.msra.mxu0 %v28
  %46 = vmatpush.msra.mxu0 %v27
  %47 = vmatpush.msra.mxu0 %v26
  %48 = vmatpush.msra.mxu0 %v25
  %49 = vmatpush.msra.mxu0 %v24
  %50 = vmatpush.msra.mxu0 %v23
  %51 = vmatpush.msra.mxu0 %v22
  %52 = vmatpush.msra.mxu0 %v21
  %53 = vmatmul.f32.gmra.mxu0 %v20
  %v54 = vpop.f32.mrf.mxu0
  %v55 = vadd.f32 0.0, %v54
  %56 = vdwg.mxu0
  %v57 = vadd.f32 %v19, %v55
  %58 = vst [vmem:[#allocation2] sm:$0xff] %v57
  // Predicated region
  $region18: #{pallas_linear.1} parent=0 // pred_check
    %p59 = pneg %p14
  $region19: #{pallas_linear.1} parent=0 // pred_check_branch
    %61 = sbr.rel (%p59) target = $region21
  $region20: #{pallas_linear.1} parent=0 // pred_region
    %v62 = vld [vmem:[#allocation2] sm:$0xff]
    %v63 = vld [vmem:[%s2] sm:$0x1]
    %v65 = vperm.slane %v63, 0
    %v67 = vadd.f32 %v62, %v65
    %68 = vst [vmem:[%s3] sm:$0xff] %v67
  $region21: #{pallas_linear.1} parent=0 // pred_fallthru
    _
  // Predicated region
  $region22: #{pallas_linear.1} parent=0 // pred_check
    _
  $region23: #{pallas_linear.1} parent=0 // pred_check_branch
    %70 = sbr.rel (0) target = $region25
  $region24: #{pallas_linear.1} parent=0 // pred_region
    _
  $region25: #{pallas_linear.1} parent=0 // pred_fallthru
    _
  // Predicated region
  $region26: #{pallas_linear.1} parent=0 // pred_check
    _
  $region27: #{pallas_linear.1} parent=0 // pred_check_branch
    %72 = sbr.rel (0) target = $region29
  $region28: #{pallas_linear.1} parent=0 // pred_region
    _
  $region29: #{pallas_linear.1} parent=0 // pred_fallthru
    _

</llo_original>
